<compile_context>
chip_gen: v7x
topology: tpu7x:2x2x1
jax: 0.10.0
libtpu: 0.0.40
codegen_flags: <defaults>
</compile_context>

<pallas_src>
import jax
import jax.numpy as jnp
from jax.experimental import pallas as pl
from jax.experimental.pallas import tpu as pltpu


def _make_focal_kernel(power):
    """Returns a kernel computing per-batch sum( t * (1-p)**power * log(p) )."""
    is_int_power = float(power) == float(int(power))
    int_power = int(power)

    def kernel(p_ref, t_ref, o_ref):
        k = pl.program_id(1)

        @pl.when(k == 0)
        def _():
            o_ref[...] = jnp.zeros_like(o_ref)

        # clamp applies to the prediction only
        p = jnp.clip(p_ref[...].astype(jnp.float32), 1e-5, 1.0)
        t = t_ref[...].astype(jnp.float32)

        omp = 1.0 - p
        if is_int_power and int_power >= 1:
            q = omp
            for _ in range(int_power - 1):
                q = q * omp
        elif is_int_power:  # power == 0
            q = jnp.ones_like(omp)
        else:
            q = jnp.power(omp, jnp.float32(power))

        term = t * q * jnp.log(p)
        # accumulate into the resident output block (reduction over chunk axis)
        o_ref[...] += jnp.sum(term).reshape(1, 1, 1)

    return kernel


def focal_loss(prediction, true, *, power=2, alpha=0.25,
               lane=512, max_block_rows=512):
    """prediction, true: (B, C, W, H, D) -> scalar float32 loss."""
    b, c, w, h, d = prediction.shape
    n = c * w * h * d

    p2 = prediction.reshape(b, n)
    t2 = true.reshape(b, n)

    # ---- choose a sublane/lane-dense tiling -------------------------------
    rows_raw = -(-n // lane)                                  # ceil(n / lane)
    rows_block = min(max_block_rows, ((rows_raw + 7) // 8) * 8)  # multiple of 8
    rows_total = ((rows_raw + rows_block - 1) // rows_block) * rows_block
    n_pad = rows_total * lane
    if n_pad != n:
        pad = n_pad - n
        # zero padding is exact: t=0 kills the padded terms, clamp keeps log finite
        p2 = jnp.pad(p2, ((0, 0), (0, pad)))
        t2 = jnp.pad(t2, ((0, 0), (0, pad)))
    p3 = p2.reshape(b, rows_total, lane)
    t3 = t2.reshape(b, rows_total, lane)
    n_chunks = rows_total // rows_block

    out = pl.pallas_call(
        _make_focal_kernel(power),
        out_shape=jax.ShapeDtypeStruct((b, 1, 1), jnp.float32),
        grid_spec=pltpu.PrefetchScalarGridSpec(
            num_scalar_prefetch=0,
            grid=(b, n_chunks),
            in_specs=[
                pl.BlockSpec((1, rows_block, lane), lambda bi, k: (bi, k, 0)),
                pl.BlockSpec((1, rows_block, lane), lambda bi, k: (bi, k, 0)),
            ],
            out_specs=pl.BlockSpec((1, 1, 1), lambda bi, k: (bi, 0, 0)),
        ),
        compiler_params=pltpu.CompilerParams(
            # batch axis can shard across TCs (v7x); chunk axis is the reduction
            dimension_semantics=("parallel", "arbitrary"),
        ),
    )(p3, t3)

    sums = out[:, 0, 0]                                   # (B,) raw per-batch sums
    # fold constant scalars (alpha, 1/(w*h*d), mean, negation) outside the kernel
    return -(alpha / (w * h * d)) * jnp.mean(sums)


def _focal_loss_ref(prediction, true, power=2, alpha=0.25):
    p = jnp.clip(prediction, 1e-5, 1.0)
    b, c, w, h, d = prediction.shape
    p = p.reshape(b, -1)
    t = true.reshape(b, -1)
    loss = alpha * t * (1.0 - p) ** power * jnp.log(p)
    loss = loss.sum(1) / (w * h * d)
    return -loss.mean(0)


if __name__ == "__main__":
    key = jax.random.PRNGKey(0)
    k1, k2 = jax.random.split(key)

    B, C, W, H, D = 2, 4, 8, 8, 8
    prediction = jax.random.uniform(k1, (B, C, W, H, D), dtype=jnp.float32)
    true = (jax.random.uniform(k2, (B, C, W, H, D), dtype=jnp.float32) > 0.5).astype(
        jnp.float32
    )

    loss = focal_loss(prediction, true, power=2, alpha=0.25)
    loss = jax.block_until_ready(loss)

    ref = _focal_loss_ref(prediction, true, power=2, alpha=0.25)
    assert jnp.allclose(loss, ref, rtol=2e-5, atol=1e-6), (loss, ref)

    print("KERNEL_OK")
</pallas_src>

<mosaic_0001>
module attributes {stable_mosaic.version = 11 : i64} {
  func.func @kernel(%arg0: i32, %arg1: i32, %arg2: memref<1x8x512xf32, #tpu.memory_space<vmem>>, %arg3: memref<1x8x512xf32, #tpu.memory_space<vmem>>, %arg4: memref<1x1x1xf32, #tpu.memory_space<vmem>>) attributes {dimension_semantics = [#tpu.dimension_semantics<parallel>, #tpu.dimension_semantics<arbitrary>], iteration_bounds = array<i64: 2, 1>, scalar_prefetch = 0 : i64, scratch_operands = 0 : i64, tpu.core_type = #tpu.core_type<tc>, window_params = [{transform_indices = @transform_0, window_bounds = array<i64: 1, 8, 512>}, {transform_indices = @transform_1, window_bounds = array<i64: 1, 8, 512>}, {transform_indices = @transform_2, window_bounds = array<i64: 1, 1, 1>}]} {
    %c0_i32 = arith.constant 0 : i32
    %0 = arith.cmpi eq, %arg1, %c0_i32 : i32
    %1 = arith.extui %0 : i1 to i32
    %c0_i32_0 = arith.constant 0 : i32
    %2 = arith.cmpi ne, %1, %c0_i32_0 : i32
    scf.if %2 {
      %cst_15 = arith.constant 0.000000e+00 : f32
      %23 = vector.broadcast %cst_15 : f32 to vector<1x1x1xf32>
      %c0_16 = arith.constant 0 : index
      %c0_17 = arith.constant 0 : index
      %c0_18 = arith.constant 0 : index
      %24 = vector.load %arg4[%c0_16, %c0_17, %c0_18] : memref<1x1x1xf32, #tpu.memory_space<vmem>>, vector<1x1x1xf32>
      tpu.vector_store %arg4[%c0_16, %c0_17, %c0_18], %23 {strides = array<i32>} : memref<1x1x1xf32, #tpu.memory_space<vmem>>, vector<1x1x1xf32>,
    } else {
    }
    %c0 = arith.constant 0 : index
    %c0_1 = arith.constant 0 : index
    %c0_2 = arith.constant 0 : index
    %3 = vector.load %arg2[%c0, %c0_1, %c0_2] : memref<1x8x512xf32, #tpu.memory_space<vmem>>, vector<1x8x512xf32>
    %cst = arith.constant 9.99999974E-6 : f32
    %cst_3 = arith.constant 1.000000e+00 : f32
    %4 = vector.broadcast %cst : f32 to vector<1x8x512xf32>
    %5 = arith.maximumf %4, %3 : vector<1x8x512xf32>
    %6 = vector.broadcast %cst_3 : f32 to vector<1x8x512xf32>
    %7 = arith.minimumf %6, %5 : vector<1x8x512xf32>
    %c0_4 = arith.constant 0 : index
    %c0_5 = arith.constant 0 : index
    %c0_6 = arith.constant 0 : index
    %8 = vector.load %arg3[%c0_4, %c0_5, %c0_6] : memref<1x8x512xf32, #tpu.memory_space<vmem>>, vector<1x8x512xf32>
    %cst_7 = arith.constant 1.000000e+00 : f32
    %9 = vector.broadcast %cst_7 : f32 to vector<1x8x512xf32>
    %10 = arith.subf %9, %7 : vector<1x8x512xf32>
    %11 = arith.mulf %10, %10 : vector<1x8x512xf32>
    %12 = arith.mulf %8, %11 : vector<1x8x512xf32>
    %13 = math.log %7 : vector<1x8x512xf32>
    %14 = arith.mulf %12, %13 : vector<1x8x512xf32>
    %c0_8 = arith.constant 0 : index
    %c0_9 = arith.constant 0 : index
    %c0_10 = arith.constant 0 : index
    %15 = vector.load %arg4[%c0_8, %c0_9, %c0_10] : memref<1x1x1xf32, #tpu.memory_space<vmem>>, vector<1x1x1xf32>
    %16 = vector.shape_cast %14 : vector<1x8x512xf32> to vector<1x1x8x512xf32>
    %cst_11 = arith.constant dense<0.000000e+00> : vector<1xf32>
    %17 = vector.multi_reduction <add>, %16, %cst_11 [1, 2, 3] : vector<1x1x8x512xf32> to vector<1xf32>
    %18 = vector.shape_cast %17 : vector<1xf32> to vector<1x1x1x1xf32>
    %19 = vector.extract %18[0, 0, 0, 0] : f32 from vector<1x1x1x1xf32>
    %20 = vector.broadcast %19 : f32 to vector<1x1x1xf32>
    %21 = arith.addf %15, %20 : vector<1x1x1xf32>
    %c0_12 = arith.constant 0 : index
    %c0_13 = arith.constant 0 : index
    %c0_14 = arith.constant 0 : index
    %22 = vector.load %arg4[%c0_12, %c0_13, %c0_14] : memref<1x1x1xf32, #tpu.memory_space<vmem>>, vector<1x1x1xf32>
    tpu.vector_store %arg4[%c0_12, %c0_13, %c0_14], %21 {strides = array<i32>} : memref<1x1x1xf32, #tpu.memory_space<vmem>>, vector<1x1x1xf32>,
    return
  }
  func.func @transform_0(%arg0: i32, %arg1: i32) -> (i32, i32, i32) {
    %c0_i32 = arith.constant 0 : i32
    %c0_i32_0 = arith.constant 0 : i32
    return %arg0, %arg1, %c0_i32 : i32, i32, i32
  }
  func.func @transform_1(%arg0: i32, %arg1: i32) -> (i32, i32, i32) {
    %c0_i32 = arith.constant 0 : i32
    %c0_i32_0 = arith.constant 0 : i32
    return %arg0, %arg1, %c0_i32 : i32, i32, i32
  }
  func.func @transform_2(%arg0: i32, %arg1: i32) -> (i32, i32, i32) {
    %c0_i32 = arith.constant 0 : i32
    %c0_i32_0 = arith.constant 0 : i32
    %c0_i32_1 = arith.constant 0 : i32
    return %arg0, %c0_i32, %c0_i32_0 : i32, i32, i32
  }
}

</mosaic_0001>

<llo_original>
// kernel: tpu_custom_call.1
$region0: #{tpu_custom_call.1}
  #allocation0 [shape = 'u32[]', space=smem, size = 0x4, offset = 0x4, fixed_abs, tag = 'smem constant byte address 0x4 - core index']
  #allocation1 [shape = 'u32[144,128]{1,0:T(1,128)}', space=vmem, size = 0x12000, scoped, tag = 'internal scratch']
  %s0 = inlined_call_operand.hbm [shape: f32[2,8,512], index: 0, kind: input, shape index: {}]
  %s1 = inlined_call_operand.hbm [shape: f32[2,8,512], index: 1, kind: input, shape index: {}]
  %s2 = inlined_call_operand.vmem [shape: f32[2,1,1], index: 2, kind: output, shape index: {}]
  %s3 = sld [smem:[#allocation0]]
  $region53: #{tpu_custom_call.1} parent=0
    _
  %s5 = ssub.s32 1, %s3
  %s6 = scalar_select 0, %s5, %s3
  $region1: #{tpu_custom_call.1} parent=0
    #allocation2 [shape = 'u8[32768]{0}', space=vmem, size = 0x8000, scoped, tag = 'input window, operand 0']
    #allocation3 [shape = 's32[2]{0}', space=sflag, size = 0x8, scoped, tag = 'scoped memory for tpu_custom_call.1']
    #allocation4 [shape = 'u8[32768]{0}', space=vmem, size = 0x8000, scoped, tag = 'input window, operand 1']
    #allocation5 [shape = 's32[2]{0}', space=sflag, size = 0x8, scoped, tag = 'scoped memory for tpu_custom_call.1']
    %7 = vsyncpa [#allocation3], 0
    %s8 = scalar_lea.sflag [#allocation3], 1
    %9 = vsyncpa %s8, 0
    %10 = vsyncpa [#allocation5], 0
    %s11 = scalar_lea.sflag [#allocation5], 1
    %12 = vsyncpa %s11, 0
    loop: start=0, step=1, limit=4
    $region2: #{tpu_custom_call.1} parent=1 // loop_pre_header
      _
    $region3: #{tpu_custom_call.1} parent=1 // loop_header
      %s14 = sphi 0, %s18
      %p15 = scmp.ge.s32.totalorder %s14, 4
      %s21 = sphi 0, %s33
      %s22 = sphi 0, %s29
      %s23 = sphi 0, %s21
      %s24 = sphi 0, %s22
      %s25 = sphi 0, %s23
      %s26 = sphi 0, %s24
      %s38 = sphi 0, %s40
      %s41 = sphi 0, %s38
      %s42 = sphi 0, %s41
      %s58 = sphi 0, %s42
      %s66 = sphi 0, %s68
      %s69 = sphi 0, %s66
      %s70 = sphi 0, %s69
      %s86 = sphi 0, %s70
      %s92 = sphi 0, %s94
      %s95 = sphi 0, %s92
      %s96 = sphi 0, %s95
      %s112 = sphi 0, %s96
    $region4: #{tpu_custom_call.1} parent=1 // loop_header_branch
      %17 = sbr.rel (%p15) target = $region8
    $region5: #{tpu_custom_call.1} parent=1 // loop_body
      %s19 = ssub.s32 %s14, 1
      %s20 = ssub.s32 %s14, 2
      %s27 = sadd.s32 1, %s22
      %p28 = scmp.ge.s32.totalorder %s27, 1
      %s29 = scalar_select %p28, 0, %s27
      %s30 = sadd.s32 1, %s21
      %s31 = scalar_select %p28, %s30, %s21
      %p32 = scmp.ge.s32.totalorder %s31, 2
      %s33 = scalar_select %p32, 0, %s31
      %s34 = ssub.s32 %s21, %s33
      %s35 = ssub.s32 %s22, %s29
      %s36 = sor.u32 %s34, %s35
      %p37 = scmp.eq.s32.totalorder %s36, 0
      %s39 = sadd.s32 %s38, 1
      %s40 = scalar_select %p37, %s38, %s39
      %p43 = pneg %p37
      %p44 = scmp.eq.s32.totalorder %s14, 1
      %p45 = por %p43, %p44
      %p46 = scmp.ne.s32.totalorder %s38, %s41
      %p47 = scmp.eq.s32.totalorder %s14, 0
      %p48 = por %p46, %p47
      %p49 = scmp.ne.s32.totalorder %s38, %s41
      %p50 = scmp.eq.s32.totalorder %s19, 1
      %p51 = por %p49, %p50
      %p52 = scmp.ne.s32.totalorder %s41, %s42
      %p53 = scmp.eq.s32.totalorder %s19, 0
      %p54 = por %p52, %p53
      %p55 = scmp.ne.s32.totalorder %s41, %s42
      %p56 = scmp.eq.s32.totalorder %s20, 1
      %p57 = por %p55, %p56
      %p59 = scmp.ne.s32.totalorder %s42, %s58
      %p60 = scmp.eq.s32.totalorder %s20, 0
      %p61 = por %p59, %p60
      %s62 = ssub.s32 %s21, %s33
      %s63 = ssub.s32 %s22, %s29
      %s64 = sor.u32 %s62, %s63
      %p65 = scmp.eq.s32.totalorder %s64, 0
      %s67 = sadd.s32 %s66, 1
      %s68 = scalar_select %p65, %s66, %s67
      %p71 = pneg %p65
      %p72 = scmp.eq.s32.totalorder %s14, 1
      %p73 = por %p71, %p72
      %p74 = scmp.ne.s32.totalorder %s66, %s69
      %p75 = scmp.eq.s32.totalorder %s14, 0
      %p76 = por %p74, %p75
      %p77 = scmp.ne.s32.totalorder %s66, %s69
      %p78 = scmp.eq.s32.totalorder %s19, 1
      %p79 = por %p77, %p78
      %p80 = scmp.ne.s32.totalorder %s69, %s70
      %p81 = scmp.eq.s32.totalorder %s19, 0
      %p82 = por %p80, %p81
      %p83 = scmp.ne.s32.totalorder %s69, %s70
      %p84 = scmp.eq.s32.totalorder %s20, 1
      %p85 = por %p83, %p84
      %p87 = scmp.ne.s32.totalorder %s70, %s86
      %p88 = scmp.eq.s32.totalorder %s20, 0
      %p89 = por %p87, %p88
      %s90 = ssub.s32 %s21, %s33
      %p91 = scmp.eq.s32.totalorder %s90, 0
      %s93 = sadd.s32 %s92, 1
      %s94 = scalar_select %p91, %s92, %s93
      %p97 = pneg %p91
      %p98 = scmp.eq.s32.totalorder %s14, 1
      %p99 = por %p97, %p98
      %p100 = scmp.ne.s32.totalorder %s92, %s95
      %p101 = scmp.eq.s32.totalorder %s14, 0
      %p102 = por %p100, %p101
      %p103 = scmp.ne.s32.totalorder %s92, %s95
      %p104 = scmp.eq.s32.totalorder %s19, 1
      %p105 = por %p103, %p104
      %p106 = scmp.ne.s32.totalorder %s95, %s96
      %p107 = scmp.eq.s32.totalorder %s19, 0
      %p108 = por %p106, %p107
      %p109 = scmp.ne.s32.totalorder %s95, %s96
      %p110 = scmp.eq.s32.totalorder %s20, 1
      %p111 = por %p109, %p110
      %p113 = scmp.ne.s32.totalorder %s96, %s112
      %p114 = scmp.eq.s32.totalorder %s20, 0
      %p115 = por %p113, %p114
      %p116 = scmp.le.s32.totalorder 1, %s14
      %p117 = scmp.lt.s32.totalorder %s14, 3
      %p118 = pnand %p116, %p117
      %p119 = pneg %p118
      // Predicated region
      $region9: #{tpu_custom_call.1} parent=5 // pred_check
        _
      $region10: #{tpu_custom_call.1} parent=5 // pred_check_branch
        %121 = sbr.rel (%p118) target = $region12
      $region11: #{tpu_custom_call.1} parent=5 // pred_region
        %s122 = ssub.s32 %s14, 1
      $region12: #{tpu_custom_call.1} parent=5 // pred_fallthru
        _
      %p123 = scmp.lt.s32.totalorder %s14, 2
      // Predicated region
      $region13: #{tpu_custom_call.1} parent=5 // pred_check
        %p124 = pneg %p123
      $region14: #{tpu_custom_call.1} parent=5 // pred_check_branch
        %126 = sbr.rel (%p124) target = $region16
      $region15: #{tpu_custom_call.1} parent=5 // pred_region
        // Predicated region
        $region17: #{tpu_custom_call.1} parent=15 // pred_check
          %p127 = pneg %p48
        $region18: #{tpu_custom_call.1} parent=15 // pred_check_branch
          %129 = sbr.rel (%p127) target = $region20
        $region19: #{tpu_custom_call.1} parent=15 // pred_region
          %s130 = sand.u32 %s38, 1
          %s131 = scalar_lea.sflag [#allocation3], %s130
          %s132 = sand.u32 %s38, 1
          %s133 = smul.addr %s132, 32
          %s134 = scalar_lea.vmem [#allocation2], %s133
          %s136 = ssub.s32 512, 512
          %137 = vsyncadd %s131, %s136
          %s138 = smul.addr %s22, 4
          %s139 = smul.addr %s21, 4
          %s140 = sadd.s32 %s138, %s139
          %s141 = smul.addr %s140, 128
          %s142 = scalar_lea.hbm %s0, %s141
          %s144 = sshll.u32 %s134, 4
          %s145 = int_to_ptr.vmem [resolvable:$true] %s144
          %147 = dma.hbm_to_vmem [thread:$0]  %s142, 512, %s145, %s131
        $region20: #{tpu_custom_call.1} parent=15 // pred_fallthru
          _
        // Predicated region
        $region21: #{tpu_custom_call.1} parent=15 // pred_check
          %p148 = pneg %p76
        $region22: #{tpu_custom_call.1} parent=15 // pred_check_branch
          %150 = sbr.rel (%p148) target = $region24
        $region23: #{tpu_custom_call.1} parent=15 // pred_region
          %s151 = sand.u32 %s66, 1
          %s152 = scalar_lea.sflag [#allocation5], %s151
          %s153 = sand.u32 %s66, 1
          %s154 = smul.addr %s153, 32
          %s155 = scalar_lea.vmem [#allocation4], %s154
          %s157 = ssub.s32 512, 512
          %158 = vsyncadd %s152, %s157
          %s159 = smul.addr %s22, 4
          %s160 = smul.addr %s21, 4
          %s161 = sadd.s32 %s159, %s160
          %s162 = smul.addr %s161, 128
          %s163 = scalar_lea.hbm %s1, %s162
          %s165 = sshll.u32 %s155, 4
          %s166 = int_to_ptr.vmem [resolvable:$true] %s165
          %168 = dma.hbm_to_vmem [thread:$0]  %s163, 512, %s166, %s152
        $region24: #{tpu_custom_call.1} parent=15 // pred_fallthru
          _
      $region16: #{tpu_custom_call.1} parent=5 // pred_fallthru
        _
      %p169 = scmp.le.s32.totalorder 1, %s14
      %p170 = scmp.lt.s32.totalorder %s14, 3
      %p171 = pnand %p169, %p170
      %p172 = pneg %p171
      // Predicated region
      $region25: #{tpu_custom_call.1} parent=5 // pred_check
        _
      $region26: #{tpu_custom_call.1} parent=5 // pred_check_branch
        %174 = sbr.rel (%p171) target = $region28
      $region27: #{tpu_custom_call.1} parent=5 // pred_region
        %s175 = ssub.s32 %s14, 1
        %s176 = sand.u32 %s41, 1
        %s177 = scalar_lea.sflag [#allocation3], %s176
        %s178 = sand.u32 %s41, 1
        %s179 = smul.addr %s178, 32
        %s180 = scalar_lea.vmem [#allocation2], %s179
        // Predicated region
        $region29: #{tpu_custom_call.1} parent=27 // pred_check
          %p181 = pneg %p54
        $region30: #{tpu_custom_call.1} parent=27 // pred_check_branch
          %183 = sbr.rel (%p181) target = $region32
        $region31: #{tpu_custom_call.1} parent=27 // pred_region
          %184 = dma.done %s177, 512
        $region32: #{tpu_custom_call.1} parent=27 // pred_fallthru
          _
        %s185 = sand.u32 %s69, 1
        %s186 = scalar_lea.sflag [#allocation5], %s185
        %s187 = sand.u32 %s69, 1
        %s188 = smul.addr %s187, 32
        %s189 = scalar_lea.vmem [#allocation4], %s188
        // Predicated region
        $region33: #{tpu_custom_call.1} parent=27 // pred_check
          %p190 = pneg %p82
        $region34: #{tpu_custom_call.1} parent=27 // pred_check_branch
          %192 = sbr.rel (%p190) target = $region36
        $region35: #{tpu_custom_call.1} parent=27 // pred_region
          %193 = dma.done %s186, 512
        $region36: #{tpu_custom_call.1} parent=27 // pred_fallthru
          _
        %s194 = sand.u32 %s41, 1
        %s195 = scalar_lea.sflag [#allocation3], %s194
        %s196 = sand.u32 %s41, 1
        %s197 = smul.addr %s196, 32
        %s198 = scalar_lea.vmem [#allocation2], %s197
        %p199 = pneg %p54
        %p200 = pneg %p51
        %s201 = sand.u32 %s69, 1
        %s202 = scalar_lea.sflag [#allocation5], %s201
        %s203 = sand.u32 %s69, 1
        %s204 = smul.addr %s203, 32
        %s205 = scalar_lea.vmem [#allocation4], %s204
        %p206 = pneg %p82
        %p207 = pneg %p79
        %p208 = pneg %p108
        %p209 = pneg %p105
        %p210 = scmp.lt.s32.totalorder %s23, 1
        %s211 = scalar_select %p210, %s23, 1
        %s212 = scalar_lea.vmem %s2, %s211
        %p213 = scmp.lt.s32.totalorder %s23, 1
        %s214 = scalar_select %p213, %s23, 1
        %s215 = scalar_lea.vmem %s2, %s214
        %p216 = scmp.eq.s32.totalorder %s24, 0
        // Predicated region
        $region37: #{tpu_custom_call.1} parent=27 // pred_check
          %p217 = pneg %p216
        $region38: #{tpu_custom_call.1} parent=27 // pred_check_branch
          %219 = sbr.rel (%p217) target = $region40
        $region39: #{tpu_custom_call.1} parent=27 // pred_region
          %vm220 = vcmask 0
          %221 = vst.msk [vmem:[%s215] sm:$0x1] %vm220, 0.0
        $region40: #{tpu_custom_call.1} parent=27 // pred_fallthru
          _
        %v222 = vld [vmem:[%s180] sm:$0xff]
        %v223 = vld [vmem:[%s180 + $0x8] sm:$0xff]
        %v224 = vld [vmem:[%s180 + $0x10] sm:$0xff]
        %v225 = vld [vmem:[%s180 + $0x18] sm:$0xff]
        %v226 = vmax.f32 %v222, 1e-05
        %v227 = vmax.f32 %v223, 1e-05
        %v228 = vmax.f32 %v224, 1e-05
        %v229 = vmax.f32 %v225, 1e-05
        %v230 = vmin.f32 %v226, 1.0
        %v231 = vmin.f32 %v227, 1.0
        %v232 = vmin.f32 %v228, 1.0
        %v233 = vmin.f32 %v229, 1.0
        %v234 = vld [vmem:[%s189] sm:$0xff]
        %v235 = vld [vmem:[%s189 + $0x8] sm:$0xff]
        %v236 = vld [vmem:[%s189 + $0x10] sm:$0xff]
        %v237 = vld [vmem:[%s189 + $0x18] sm:$0xff]
        %v238 = vsub.f32 1.0, %v230
        %v239 = vsub.f32 1.0, %v231
        %v240 = vsub.f32 1.0, %v232
        %v241 = vsub.f32 1.0, %v233
        %v242 = vmul.f32 %v238, %v238
        %v243 = vmul.f32 %v239, %v239
        %v244 = vmul.f32 %v240, %v240
        %v245 = vmul.f32 %v241, %v241
        %v246 = vmul.f32 %v234, %v242
        %v247 = vmul.f32 %v235, %v243
        %v248 = vmul.f32 %v236, %v244
        %v249 = vmul.f32 %v237, %v245
        %v250 = vlog2.pop %v230
        %v251 = vmul.f32 %v250, 0.6931472
        %v252 = vlog2.pop %v231
        %v253 = vmul.f32 %v252, 0.6931472
        %v254 = vlog2.pop %v232
        %v255 = vmul.f32 %v254, 0.6931472
        %v256 = vlog2.pop %v233
        %v257 = vmul.f32 %v256, 0.6931472
        %v258 = vmul.f32 %v246, %v251
        %v259 = vmul.f32 %v247, %v253
        %v260 = vmul.f32 %v248, %v255
        %v261 = vmul.f32 %v249, %v257
        %v262 = vld [vmem:[%s215] sm:$0x1]
        %v263 = vadd.f32 %v258, %v259
        %v264 = vadd.f32 %v263, %v260
        %v265 = vadd.f32 %v264, %v261
        %266 = vadd.xlane.f32.xlu0 %v265
        %v267 = vpop.xlane.xlu0 %266
        %v268 = vrot.slane %v267, 4
        %v269 = vadd.f32 %v267, %v268
        %v270 = vrot.slane %v269, 2
        %v271 = vadd.f32 %v269, %v270
        %v272 = vrot.slane %v271, 1
        %v273 = vadd.f32 %v271, %v272
        %s274 = vtos %v273
        %v275 = vstv %s274
        %v276 = vadd.f32 %v262, %v275
        %vm277 = vcmask 0
        %278 = vst.msk [vmem:[%s215] sm:$0x1] %vm277, %v276
        %p279 = scmp.lt.s32.totalorder %s23, 1
        %s280 = scalar_select %p279, %s23, 1
        %s281 = scalar_lea.vmem %s2, %s280
        // Predicated region
        $region41: #{tpu_custom_call.1} parent=27 // pred_check
          %p282 = pneg %p105
        $region42: #{tpu_custom_call.1} parent=27 // pred_check_branch
          %284 = sbr.rel (%p282) target = $region44
        $region43: #{tpu_custom_call.1} parent=27 // pred_region
          _
        $region44: #{tpu_custom_call.1} parent=27 // pred_fallthru
          _
      $region28: #{tpu_custom_call.1} parent=5 // pred_fallthru
        _
      %p285 = scmp.le.s32.totalorder 2, %s14
      // Predicated region
      $region45: #{tpu_custom_call.1} parent=5 // pred_check
        %p286 = pneg %p285
      $region46: #{tpu_custom_call.1} parent=5 // pred_check_branch
        %288 = sbr.rel (%p286) target = $region48
      $region47: #{tpu_custom_call.1} parent=5 // pred_region
        %s289 = ssub.s32 %s14, 2
        // Predicated region
        $region49: #{tpu_custom_call.1} parent=47 // pred_check
          %p290 = pneg %p111
        $region50: #{tpu_custom_call.1} parent=47 // pred_check_branch
          %292 = sbr.rel (%p290) target = $region52
        $region51: #{tpu_custom_call.1} parent=47 // pred_region
          %p293 = scmp.lt.s32.totalorder %s25, 1
          %s294 = scalar_select %p293, %s25, 1
          %s295 = scalar_lea.vmem %s2, %s294
        $region52: #{tpu_custom_call.1} parent=47 // pred_fallthru
          _
      $region48: #{tpu_custom_call.1} parent=5 // pred_fallthru
        _
    $region6: #{tpu_custom_call.1} parent=1 // loop_footer
      %s18 = sadd.s32 1, %s14
    $region7: #{tpu_custom_call.1} parent=1 // loop_footer_branch
      %13 = sbr.rel target = $region3
    $region8: #{tpu_custom_call.1} parent=1 // loop_exit
      _
    %296 = vsyncpa [#allocation3], 1
    %s297 = scalar_lea.sflag [#allocation3], 1
    %298 = vsyncpa %s297, 1
    %299 = vsyncpa [#allocation5], 1
    %s300 = scalar_lea.sflag [#allocation5], 1
    %301 = vsyncpa %s300, 1

</llo_original>
